<compile_context>
chip_gen: v5e
topology: v5e:2x2
jax: 0.10.0
libtpu: 0.0.40
codegen_flags: <defaults>
</compile_context>

<pallas_src>
import functools

import jax
import jax.numpy as jnp
from jax.experimental import pallas as pl
from jax.experimental.pallas import tpu as pltpu

EPS = 1e-5  # PyTorch InstanceNorm2d default


# ---------------------------------------------------------------------------
# Pallas kernel: fused conv-matmul + InstanceNorm(affine) + ReLU
# ---------------------------------------------------------------------------
def singleconv_kernel(patch_ref, w_ref, gb_ref, o_ref):
    # patch_ref: (1, CKK, T)   bf16  im2col patches, spatial tile on lanes
    # w_ref:     (OC, CKK)     bf16  conv weight (resident across grid)
    # gb_ref:    (OC, 2)       f32   [:, 0] = gamma, [:, 1] = beta (resident)
    # o_ref:     (1, OC, OHW)  f32   resident across the spatial-tile sweep
    t = pl.program_id(1)
    tile = patch_ref.shape[2]

    # Conv as an MXU matmul with the spatial axis on lanes; f32 accumulation.
    y = jnp.dot(w_ref[...], patch_ref[0], preferred_element_type=jnp.float32)

    off = t * tile
    if tile % 128 == 0:
        off = pl.multiple_of(off, 128)
    o_ref[0, :, pl.ds(off, tile)] = y

    # Finalize once the full spatial extent is resident: InstanceNorm + ReLU.
    # (Conv bias is omitted entirely: it is cancelled by the mean subtraction.)
    @pl.when(t == pl.num_programs(1) - 1)
    def _():
        yf = o_ref[0]                                        # (OC, OHW) f32
        mean = jnp.mean(yf, axis=1, keepdims=True)           # (OC, 1)
        d = yf - mean
        var = jnp.mean(d * d, axis=1, keepdims=True)         # biased var (PyTorch)
        scale = gb_ref[:, 0:1] * jax.lax.rsqrt(var + EPS)    # gamma folded into scale
        o_ref[0] = jnp.maximum(d * scale + gb_ref[:, 1:2], 0.0)


# ---------------------------------------------------------------------------
# Glue: im2col (pure JAX, static unroll over the KxK window) — NO transpose,
# natural output layout is already (N, C*K*K, OH*OW) = channel-major.
# ---------------------------------------------------------------------------
def im2col(x, kernel_size, stride, padding):
    N, C, H, W = x.shape
    K = kernel_size
    xp = jnp.pad(x, ((0, 0), (0, 0), (padding, padding), (padding, padding)))
    OH = (H + 2 * padding - K) // stride + 1
    OW = (W + 2 * padding - K) // stride + 1
    cols = []
    for i in range(K):
        for j in range(K):
            cols.append(xp[:, :, i:i + stride * OH:stride, j:j + stride * OW:stride])
    p = jnp.stack(cols, axis=2)                 # (N, C, K*K, OH, OW)
    p = p.reshape(N, C * K * K, OH * OW)        # (N, CKK, OHW); row order (c, ki, kj)
    return p, OH, OW


def _spatial_tile(ohw):
    # Full extent when small; otherwise the largest 128-aligned divisor <= 4096.
    if ohw <= 4096:
        return ohw
    for t in (4096, 2048, 1024, 512, 256, 128):
        if ohw % t == 0:
            return t
    return ohw


# ---------------------------------------------------------------------------
# Wrapper
# ---------------------------------------------------------------------------
@functools.partial(jax.jit, static_argnames=("kernel_size", "stride", "padding"))
def single_conv(x, weight, bias, gamma, beta, *, kernel_size, stride, padding):
    """x: (N, C, H, W); weight: (OC, C, K, K); bias/gamma/beta: (OC,).
    Returns (N, OC, OH, OW), matching PyTorch SingleConv.forward (float32)."""
    del bias  # exactly cancelled by InstanceNorm's per-channel mean subtraction
    N, C, H, W = x.shape
    OC = weight.shape[0]
    K = kernel_size

    patches, OH, OW = im2col(x, K, stride, padding)            # (N, CKK, OHW)
    OHW = OH * OW
    CKK = C * K * K
    TILE = _spatial_tile(OHW)
    n_tiles = OHW // TILE

    patches = patches.astype(jnp.bfloat16)
    w2d = weight.reshape(OC, CKK).astype(jnp.bfloat16)         # (OC, CKK)
    gb = jnp.stack([gamma, beta], axis=1).astype(jnp.float32)  # (OC, 2)

    out = pl.pallas_call(
        singleconv_kernel,
        out_shape=jax.ShapeDtypeStruct((N, OC, OHW), jnp.float32),
        grid_spec=pltpu.PrefetchScalarGridSpec(
            num_scalar_prefetch=0,
            grid=(N, n_tiles),
            in_specs=[
                pl.BlockSpec((1, CKK, TILE), lambda n, t: (n, 0, t)),
                pl.BlockSpec((OC, CKK), lambda n, t: (0, 0)),
                pl.BlockSpec((OC, 2), lambda n, t: (0, 0)),
            ],
            out_specs=pl.BlockSpec((1, OC, OHW), lambda n, t: (n, 0, 0)),
        ),
        compiler_params=pltpu.CompilerParams(
            dimension_semantics=("parallel", "arbitrary"),
            vmem_limit_bytes=32 * 1024 * 1024,
        ),
    )(patches, w2d, gb)

    # (N, OC, OHW) is already channel-major -> plain reshape to NCHW, no transpose.
    return out.reshape(N, OC, OH, OW)


# ---------------------------------------------------------------------------
# Pure-JAX reference (f32, includes the bias) for verification
# ---------------------------------------------------------------------------
def reference(x, weight, bias, gamma, beta, *, kernel_size, stride, padding):
    y = jax.lax.conv_general_dilated(
        x, weight, window_strides=(stride, stride),
        padding=((padding, padding), (padding, padding)),
        dimension_numbers=("NCHW", "OIHW", "NCHW"))
    y = y + bias.reshape(1, -1, 1, 1)
    mean = jnp.mean(y, axis=(2, 3), keepdims=True)
    var = jnp.mean((y - mean) ** 2, axis=(2, 3), keepdims=True)
    y = (y - mean) * jax.lax.rsqrt(var + EPS)
    y = y * gamma.reshape(1, -1, 1, 1) + beta.reshape(1, -1, 1, 1)
    return jnp.maximum(y, 0.0)


if __name__ == "__main__":
    # SingleConv(in_ch=4, out_ch=8, kernel_size=3, stride=1, padding=1)
    in_ch, out_ch, K, stride, padding = 4, 8, 3, 1, 1
    N, H, W = 2, 16, 16

    key = jax.random.PRNGKey(0)
    kx, kw, kb, kg, kbe = jax.random.split(key, 5)

    x = jax.random.normal(kx, (N, in_ch, H, W), dtype=jnp.float32)
    weight = 0.1 * jax.random.normal(kw, (out_ch, in_ch, K, K), dtype=jnp.float32)
    bias = 0.1 * jax.random.normal(kb, (out_ch,), dtype=jnp.float32)
    gamma = 1.0 + 0.1 * jax.random.normal(kg, (out_ch,), dtype=jnp.float32)
    beta = 0.1 * jax.random.normal(kbe, (out_ch,), dtype=jnp.float32)

    out = single_conv(x, weight, bias, gamma, beta,
                      kernel_size=K, stride=stride, padding=padding)
    out = jax.block_until_ready(out)

    ref = reference(x, weight, bias, gamma, beta,
                    kernel_size=K, stride=stride, padding=padding)
    assert out.shape == ref.shape == (N, out_ch, H, W)
    # bf16 matmul inputs with f32 accumulation -> slightly looser tolerance.
    assert jnp.allclose(out, ref, atol=2e-2, rtol=2e-2), "mismatch vs reference"

    print("KERNEL_OK")
</pallas_src>

<mosaic_0001>
module attributes {stable_mosaic.version = 11 : i64} {
  func.func @singleconv_kernel(%arg0: i32, %arg1: i32, %arg2: memref<1x36x256xbf16, #tpu.memory_space<vmem>>, %arg3: memref<8x36xbf16, #tpu.memory_space<vmem>>, %arg4: memref<8x2xf32, #tpu.memory_space<vmem>>, %arg5: memref<1x8x256xf32, #tpu.memory_space<vmem>>) attributes {dimension_semantics = [#tpu.dimension_semantics<parallel>, #tpu.dimension_semantics<arbitrary>], iteration_bounds = array<i64: 2, 1>, scalar_prefetch = 0 : i64, scratch_operands = 0 : i64, tpu.core_type = #tpu.core_type<tc>, window_params = [{transform_indices = @transform_0, window_bounds = array<i64: 1, 36, 256>}, {pipeline_mode = #tpu.pipeline_mode<synchronous>, transform_indices = @transform_1, window_bounds = array<i64: 8, 36>}, {pipeline_mode = #tpu.pipeline_mode<synchronous>, transform_indices = @transform_2, window_bounds = array<i64: 8, 2>}, {transform_indices = @transform_3, window_bounds = array<i64: 1, 8, 256>}]} {
    %c0 = arith.constant 0 : index
    %c0_0 = arith.constant 0 : index
    %0 = vector.load %arg3[%c0, %c0_0] : memref<8x36xbf16, #tpu.memory_space<vmem>>, vector<8x36xbf16>
    %c0_1 = arith.constant 0 : index
    %c0_2 = arith.constant 0 : index
    %c0_3 = arith.constant 0 : index
    %1 = vector.load %arg2[%c0_1, %c0_2, %c0_3] : memref<1x36x256xbf16, #tpu.memory_space<vmem>>, vector<1x36x256xbf16>
    %2 = vector.shape_cast %1 : vector<1x36x256xbf16> to vector<36x256xbf16>
    %cst = arith.constant dense<0.000000e+00> : vector<8x256xf32>
    %3 = tpu.matmul %0, %2, %cst {dimension_numbers = #tpu.dot_dimension_numbers<[1], [0], [0], [1], [0, 0, 1, 1], [], []>} : vector<8x36xbf16>, vector<36x256xbf16>, vector<8x256xf32> -> vector<8x256xf32>
    %c256_i32 = arith.constant 256 : i32
    %4 = arith.muli %arg1, %c256_i32 : i32
    %5 = tpu.assume_multiple %4, 128 : i32
    %c0_4 = arith.constant 0 : index
    %c0_5 = arith.constant 0 : index
    %6 = arith.index_cast %5 : i32 to index
    %7 = vector.load %arg5[%c0_4, %c0_5, %6] : memref<1x8x256xf32, #tpu.memory_space<vmem>>, vector<1x8x256xf32>
    %8 = vector.shape_cast %7 : vector<1x8x256xf32> to vector<8x256xf32>
    %9 = vector.shape_cast %3 : vector<8x256xf32> to vector<1x8x256xf32>
    tpu.vector_store %arg5[%c0_4, %c0_5, %6], %9 {strides = array<i32>} : memref<1x8x256xf32, #tpu.memory_space<vmem>>, vector<1x8x256xf32>,
    %c0_i32 = arith.constant 0 : i32
    %10 = arith.cmpi eq, %arg1, %c0_i32 : i32
    %11 = arith.extui %10 : i1 to i32
    %c0_i32_6 = arith.constant 0 : i32
    %12 = arith.cmpi ne, %11, %c0_i32_6 : i32
    scf.if %12 {
      %c0_7 = arith.constant 0 : index
      %c0_8 = arith.constant 0 : index
      %c0_9 = arith.constant 0 : index
      %13 = vector.load %arg5[%c0_7, %c0_8, %c0_9] : memref<1x8x256xf32, #tpu.memory_space<vmem>>, vector<1x8x256xf32>
      %14 = vector.shape_cast %13 : vector<1x8x256xf32> to vector<8x256xf32>
      %cst_10 = arith.constant dense<0.000000e+00> : vector<8xf32>
      %15 = vector.multi_reduction <add>, %14, %cst_10 [1] : vector<8x256xf32> to vector<8xf32>
      %16 = vector.shape_cast %15 : vector<8xf32> to vector<8x1xf32>
      %cst_11 = arith.constant 2.560000e+02 : f32
      %17 = vector.broadcast %cst_11 : f32 to vector<8x1xf32>
      %18 = arith.divf %16, %17 : vector<8x1xf32>
      %19 = vector.broadcast %18 : vector<8x1xf32> to vector<8x256xf32>
      %20 = arith.subf %14, %19 : vector<8x256xf32>
      %21 = arith.mulf %20, %20 : vector<8x256xf32>
      %cst_12 = arith.constant dense<0.000000e+00> : vector<8xf32>
      %22 = vector.multi_reduction <add>, %21, %cst_12 [1] : vector<8x256xf32> to vector<8xf32>
      %23 = vector.shape_cast %22 : vector<8xf32> to vector<8x1xf32>
      %cst_13 = arith.constant 2.560000e+02 : f32
      %24 = vector.broadcast %cst_13 : f32 to vector<8x1xf32>
      %25 = arith.divf %23, %24 : vector<8x1xf32>
      %c0_14 = arith.constant 0 : index
      %c0_15 = arith.constant 0 : index
      %26 = vector.load %arg4[%c0_14, %c0_15] : memref<8x2xf32, #tpu.memory_space<vmem>>, vector<8x1xf32>
      %cst_16 = arith.constant 9.99999974E-6 : f32
      %27 = vector.broadcast %cst_16 : f32 to vector<8x1xf32>
      %28 = arith.addf %25, %27 : vector<8x1xf32>
      %29 = math.rsqrt %28 : vector<8x1xf32>
      %30 = arith.mulf %26, %29 : vector<8x1xf32>
      %31 = vector.broadcast %30 : vector<8x1xf32> to vector<8x256xf32>
      %32 = arith.mulf %20, %31 : vector<8x256xf32>
      %c0_17 = arith.constant 0 : index
      %c1 = arith.constant 1 : index
      %33 = vector.load %arg4[%c0_17, %c1] : memref<8x2xf32, #tpu.memory_space<vmem>>, vector<8x1xf32>
      %34 = vector.broadcast %33 : vector<8x1xf32> to vector<8x256xf32>
      %35 = arith.addf %32, %34 : vector<8x256xf32>
      %cst_18 = arith.constant 0.000000e+00 : f32
      %36 = vector.broadcast %cst_18 : f32 to vector<8x256xf32>
      %37 = arith.maximumf %35, %36 : vector<8x256xf32>
      %c0_19 = arith.constant 0 : index
      %c0_20 = arith.constant 0 : index
      %c0_21 = arith.constant 0 : index
      %38 = vector.load %arg5[%c0_19, %c0_20, %c0_21] : memref<1x8x256xf32, #tpu.memory_space<vmem>>, vector<1x8x256xf32>
      %39 = vector.shape_cast %38 : vector<1x8x256xf32> to vector<8x256xf32>
      %40 = vector.shape_cast %37 : vector<8x256xf32> to vector<1x8x256xf32>
      tpu.vector_store %arg5[%c0_19, %c0_20, %c0_21], %40 {strides = array<i32>} : memref<1x8x256xf32, #tpu.memory_space<vmem>>, vector<1x8x256xf32>,
    } else {
    }
    return
  }
  func.func @transform_0(%arg0: i32, %arg1: i32) -> (i32, i32, i32) {
    %c0_i32 = arith.constant 0 : i32
    %c0_i32_0 = arith.constant 0 : i32
    return %arg0, %c0_i32, %arg1 : i32, i32, i32
  }
  func.func @transform_1(%arg0: i32, %arg1: i32) -> (i32, i32) {
    %c0_i32 = arith.constant 0 : i32
    %c0_i32_0 = arith.constant 0 : i32
    %c0_i32_1 = arith.constant 0 : i32
    return %c0_i32, %c0_i32_0 : i32, i32
  }
  func.func @transform_2(%arg0: i32, %arg1: i32) -> (i32, i32) {
    %c0_i32 = arith.constant 0 : i32
    %c0_i32_0 = arith.constant 0 : i32
    %c0_i32_1 = arith.constant 0 : i32
    return %c0_i32, %c0_i32_0 : i32, i32
  }
  func.func @transform_3(%arg0: i32, %arg1: i32) -> (i32, i32, i32) {
    %c0_i32 = arith.constant 0 : i32
    %c0_i32_0 = arith.constant 0 : i32
    %c0_i32_1 = arith.constant 0 : i32
    return %arg0, %c0_i32, %c0_i32_0 : i32, i32, i32
  }
}

</mosaic_0001>

<llo_original>
// kernel: single_conv.1
$region0: #{single_conv.1}
  #allocation0 [shape = 'u32[]', space=smem, size = 0x4, offset = 0x4, fixed_abs, tag = 'smem constant byte address 0x4 - core index']
  #allocation1 [shape = 'u32[72,128]{1,0:T(1,128)}', space=vmem, size = 0x9000, scoped, tag = 'internal scratch']
  %s0 = inlined_call_operand.vmem [shape: bf16[2,36,256], index: 0, kind: input, shape index: {}]
  %s1 = inlined_call_operand.vmem [shape: bf16[8,36], index: 1, kind: input, shape index: {}]
  %s2 = inlined_call_operand.vmem [shape: f32[8,2], index: 2, kind: input, shape index: {}]
  %s3 = inlined_call_operand.vmem [shape: f32[2,8,256], index: 3, kind: output, shape index: {}]
  %s4 = sld [smem:[#allocation0]]
  $region49: #{single_conv.1} parent=0
    _
  %s6 = ssub.s32 1, %s4
  %s7 = scalar_select 0, %s6, %s4
  loop: start=0, step=1, limit=4
  $region2: #{single_conv.1} parent=0 // loop_pre_header
    _
  $region3: #{single_conv.1} parent=0 // loop_header
    %s9 = sphi 0, %s13
    %p10 = scmp.ge.s32.totalorder %s9, 4
    %s16 = sphi 0, %s28
    %s17 = sphi 0, %s24
    %s18 = sphi 0, %s16
    %s19 = sphi 0, %s17
    %s20 = sphi 0, %s18
    %s21 = sphi 0, %s19
    %s33 = sphi 0, %s35
    %s36 = sphi 0, %s33
    %s37 = sphi 0, %s36
    %s53 = sphi 0, %s37
    %s57 = sphi 0, %s57
    %s59 = sphi 0, %s57
    %s60 = sphi 0, %s59
    %s74 = sphi 0, %s60
    %s78 = sphi 0, %s78
    %s80 = sphi 0, %s78
    %s81 = sphi 0, %s80
    %s95 = sphi 0, %s81
    %s101 = sphi 0, %s103
    %s104 = sphi 0, %s101
    %s105 = sphi 0, %s104
    %s121 = sphi 0, %s105
  $region4: #{single_conv.1} parent=0 // loop_header_branch
    %12 = sbr.rel (%p10) target = $region8
  $region5: #{single_conv.1} parent=0 // loop_body
    %s14 = ssub.s32 %s9, 1
    %s15 = ssub.s32 %s9, 2
    %s22 = sadd.s32 1, %s17
    %p23 = scmp.ge.s32.totalorder %s22, 1
    %s24 = scalar_select %p23, 0, %s22
    %s25 = sadd.s32 1, %s16
    %s26 = scalar_select %p23, %s25, %s16
    %p27 = scmp.ge.s32.totalorder %s26, 2
    %s28 = scalar_select %p27, 0, %s26
    %s29 = ssub.s32 %s16, %s28
    %s30 = ssub.s32 %s17, %s24
    %s31 = sor.u32 %s29, %s30
    %p32 = scmp.eq.s32.totalorder %s31, 0
    %s34 = sadd.s32 %s33, 1
    %s35 = scalar_select %p32, %s33, %s34
    %p38 = pneg %p32
    %p39 = scmp.eq.s32.totalorder %s9, 1
    %p40 = por %p38, %p39
    %p41 = scmp.ne.s32.totalorder %s33, %s36
    %p42 = scmp.eq.s32.totalorder %s9, 0
    %p43 = por %p41, %p42
    %p44 = scmp.ne.s32.totalorder %s33, %s36
    %p45 = scmp.eq.s32.totalorder %s14, 1
    %p46 = por %p44, %p45
    %p47 = scmp.ne.s32.totalorder %s36, %s37
    %p48 = scmp.eq.s32.totalorder %s14, 0
    %p49 = por %p47, %p48
    %p50 = scmp.ne.s32.totalorder %s36, %s37
    %p51 = scmp.eq.s32.totalorder %s15, 1
    %p52 = por %p50, %p51
    %p54 = scmp.ne.s32.totalorder %s37, %s53
    %p55 = scmp.eq.s32.totalorder %s15, 0
    %p56 = por %p54, %p55
    %s58 = sadd.s32 %s57, 1
    %p61 = scmp.eq.s32.totalorder %s9, 1
    %p62 = scmp.ne.s32.totalorder %s57, %s59
    %p63 = scmp.eq.s32.totalorder %s9, 0
    %p64 = por %p62, %p63
    %p65 = scmp.ne.s32.totalorder %s57, %s59
    %p66 = scmp.eq.s32.totalorder %s14, 1
    %p67 = por %p65, %p66
    %p68 = scmp.ne.s32.totalorder %s59, %s60
    %p69 = scmp.eq.s32.totalorder %s14, 0
    %p70 = por %p68, %p69
    %p71 = scmp.ne.s32.totalorder %s59, %s60
    %p72 = scmp.eq.s32.totalorder %s15, 1
    %p73 = por %p71, %p72
    %p75 = scmp.ne.s32.totalorder %s60, %s74
    %p76 = scmp.eq.s32.totalorder %s15, 0
    %p77 = por %p75, %p76
    %s79 = sadd.s32 %s78, 1
    %p82 = scmp.eq.s32.totalorder %s9, 1
    %p83 = scmp.ne.s32.totalorder %s78, %s80
    %p84 = scmp.eq.s32.totalorder %s9, 0
    %p85 = por %p83, %p84
    %p86 = scmp.ne.s32.totalorder %s78, %s80
    %p87 = scmp.eq.s32.totalorder %s14, 1
    %p88 = por %p86, %p87
    %p89 = scmp.ne.s32.totalorder %s80, %s81
    %p90 = scmp.eq.s32.totalorder %s14, 0
    %p91 = por %p89, %p90
    %p92 = scmp.ne.s32.totalorder %s80, %s81
    %p93 = scmp.eq.s32.totalorder %s15, 1
    %p94 = por %p92, %p93
    %p96 = scmp.ne.s32.totalorder %s81, %s95
    %p97 = scmp.eq.s32.totalorder %s15, 0
    %p98 = por %p96, %p97
    %s99 = ssub.s32 %s16, %s28
    %p100 = scmp.eq.s32.totalorder %s99, 0
    %s102 = sadd.s32 %s101, 1
    %s103 = scalar_select %p100, %s101, %s102
    %p106 = pneg %p100
    %p107 = scmp.eq.s32.totalorder %s9, 1
    %p108 = por %p106, %p107
    %p109 = scmp.ne.s32.totalorder %s101, %s104
    %p110 = scmp.eq.s32.totalorder %s9, 0
    %p111 = por %p109, %p110
    %p112 = scmp.ne.s32.totalorder %s101, %s104
    %p113 = scmp.eq.s32.totalorder %s14, 1
    %p114 = por %p112, %p113
    %p115 = scmp.ne.s32.totalorder %s104, %s105
    %p116 = scmp.eq.s32.totalorder %s14, 0
    %p117 = por %p115, %p116
    %p118 = scmp.ne.s32.totalorder %s104, %s105
    %p119 = scmp.eq.s32.totalorder %s15, 1
    %p120 = por %p118, %p119
    %p122 = scmp.ne.s32.totalorder %s105, %s121
    %p123 = scmp.eq.s32.totalorder %s15, 0
    %p124 = por %p122, %p123
    %p125 = scmp.le.s32.totalorder 1, %s9
    %p126 = scmp.lt.s32.totalorder %s9, 3
    %p127 = pnand %p125, %p126
    %p128 = pneg %p127
    // Predicated region
    $region9: #{single_conv.1} parent=5 // pred_check
      _
    $region10: #{single_conv.1} parent=5 // pred_check_branch
      %130 = sbr.rel (%p127) target = $region12
    $region11: #{single_conv.1} parent=5 // pred_region
      %s131 = ssub.s32 %s9, 1
      // Predicated region
      $region13: #{single_conv.1} parent=11 // pred_check
        %p132 = pneg %p70
      $region14: #{single_conv.1} parent=11 // pred_check_branch
        %134 = sbr.rel (%p132) target = $region16
      $region15: #{single_conv.1} parent=11 // pred_region
        _
      $region16: #{single_conv.1} parent=11 // pred_fallthru
        _
      // Predicated region
      $region17: #{single_conv.1} parent=11 // pred_check
        %p135 = pneg %p91
      $region18: #{single_conv.1} parent=11 // pred_check_branch
        %137 = sbr.rel (%p135) target = $region20
      $region19: #{single_conv.1} parent=11 // pred_region
        _
      $region20: #{single_conv.1} parent=11 // pred_fallthru
        _
    $region12: #{single_conv.1} parent=5 // pred_fallthru
      _
    %p138 = scmp.lt.s32.totalorder %s9, 2
    // Predicated region
    $region21: #{single_conv.1} parent=5 // pred_check
      %p139 = pneg %p138
    $region22: #{single_conv.1} parent=5 // pred_check_branch
      %141 = sbr.rel (%p139) target = $region24
    $region23: #{single_conv.1} parent=5 // pred_region
      // Predicated region
      $region25: #{single_conv.1} parent=23 // pred_check
        %p142 = pneg %p43
      $region26: #{single_conv.1} parent=23 // pred_check_branch
        %144 = sbr.rel (%p142) target = $region28
      $region27: #{single_conv.1} parent=23 // pred_region
        %s145 = smul.u32 2, %s17
        %p146 = scmp.lt.s32.totalorder %s16, 1
        %s147 = scalar_select %p146, %s16, 1
        %p148 = scmp.lt.s32.totalorder %s145, 1
        %s149 = scalar_select %p148, %s145, 1
        %s150 = smul.addr %s147, 10
        %s151 = sadd.s32 %s149, %s150
        %s152 = smul.addr %s151, 4
        %s153 = scalar_lea.vmem %s0, %s152
        %s154 = smul.u32 2, %s17
      $region28: #{single_conv.1} parent=23 // pred_fallthru
        _
    $region24: #{single_conv.1} parent=5 // pred_fallthru
      _
    %p155 = scmp.le.s32.totalorder 1, %s9
    %p156 = scmp.lt.s32.totalorder %s9, 3
    %p157 = pnand %p155, %p156
    %p158 = pneg %p157
    // Predicated region
    $region29: #{single_conv.1} parent=5 // pred_check
      _
    $region30: #{single_conv.1} parent=5 // pred_check_branch
      %160 = sbr.rel (%p157) target = $region32
    $region31: #{single_conv.1} parent=5 // pred_region
      %s161 = ssub.s32 %s9, 1
      %s162 = smul.u32 2, %s19
      %p163 = scmp.lt.s32.totalorder %s18, 1
      %s164 = scalar_select %p163, %s18, 1
      %p165 = scmp.lt.s32.totalorder %s162, 1
      %s166 = scalar_select %p165, %s162, 1
      %s167 = smul.addr %s164, 10
      %s168 = sadd.s32 %s166, %s167
      %s169 = smul.addr %s168, 4
      %s170 = scalar_lea.vmem %s0, %s169
      %p171 = pneg %p49
      %p172 = pneg %p46
      %p173 = pneg %p70
      %p174 = pneg %p67
      %p175 = pneg %p91
      %p176 = pneg %p88
      %p177 = pneg %p117
      %p178 = pneg %p114
      %p179 = scmp.lt.s32.totalorder %s18, 1
      %s180 = scalar_select %p179, %s18, 1
      %s181 = smul.addr %s180, 2
      %s182 = smul.addr %s181, 8
      %s183 = scalar_lea.vmem %s3, %s182
      %s184 = smul.u32 2, %s19
      %p185 = scmp.lt.s32.totalorder %s18, 1
      %s186 = scalar_select %p185, %s18, 1
      %p187 = scmp.lt.s32.totalorder %s184, 1
      %s188 = scalar_select %p187, %s184, 1
      %s189 = smul.addr %s186, 10
      %s190 = sadd.s32 %s188, %s189
      %s191 = smul.addr %s190, 4
      %s192 = scalar_lea.vmem %s0, %s191
      %s193 = smul.u32 2, %s19
      %p194 = scmp.lt.s32.totalorder %s18, 1
      %s195 = scalar_select %p194, %s18, 1
      %s196 = smul.addr %s195, 2
      %s197 = smul.addr %s196, 8
      %s198 = scalar_lea.vmem %s3, %s197
      %v200 = vld [vmem:[%s1] sm:$0xf]
      %v201 = vld [vmem:[%s192] sm:$0xff]
      %v202 = vld [vmem:[%s192 + $0x8] sm:$0xff]
      %v203 = vld [vmem:[%s192 + $0x10] sm:$0xff]
      %v204 = vld [vmem:[%s192 + $0x18] sm:$0xff]
      %v205 = vld [vmem:[%s192 + $0x20] sm:$0x33]
      %v211 = vunpack.c.l.b16 %v201
      %v212 = vunpack.c.h.b16 %v201
      %v213 = vunpack.c.l.b16 %v202
      %v214 = vunpack.c.h.b16 %v202
      %v215 = vunpack.c.l.b16 %v203
      %v216 = vunpack.c.h.b16 %v203
      %v217 = vunpack.c.l.b16 %v204
      %v218 = vunpack.c.h.b16 %v204
      %v219 = vunpack.c.l.b16 %v205
      %v220 = vunpack.c.h.b16 %v205
      %v221 = vpack.c.b16 %v213, %v211
      %v222 = vpack.c.b16 %v214, %v212
      %v223 = vpack.c.b16 %v217, %v215
      %v224 = vpack.c.b16 %v218, %v216
      %v225 = vpack.c.b16 %v219, %v219
      %v226 = vpack.c.b16 %v220, %v220
      %vm231 = vcmask 293888
      %v233 = vsel %vm231, %v200, 0
      %vm235 = vcmask 1041408
      %v237 = vsel %vm235, %v225, 0
      %v240 = vsel %vm235, %v226, 0
      %242 = vmatpush.bf16.msra.mxu0 0
      %243 = vmatpush.bf16.msra.mxu0 0
      %244 = vmatpush.bf16.msra.mxu0 0
      %245 = vmatpush.bf16.msra.mxu0 0
      %246 = vmatpush.bf16.msra.mxu0 0
      %247 = vmatpush.bf16.msra.mxu0 %v237
      %248 = vmatpush.bf16.msra.mxu0 %v223
      %249 = vmatpush.bf16.msra.mxu0 %v221
      %250 = vmatmul.bf16.gmra.mxu0 %v233
      %v251 = vpop.f32.mrf.mxu0
      %v252 = vadd.f32 0.0, %v251
      %v253 = vpop.f32.mrf.mxu0
      %254 = vdwg.mxu0
      %255 = vmatpush.bf16.msra.mxu0 0
      %256 = vmatpush.bf16.msra.mxu0 0
      %257 = vmatpush.bf16.msra.mxu0 0
      %258 = vmatpush.bf16.msra.mxu0 0
      %259 = vmatpush.bf16.msra.mxu0 0
      %260 = vmatpush.bf16.msra.mxu0 %v240
      %261 = vmatpush.bf16.msra.mxu0 %v224
      %262 = vmatpush.bf16.msra.mxu0 %v222
      %263 = vmatmul.bf16.gmra.mxu0 %v233
      %v264 = vpop.f32.mrf.mxu0
      %v265 = vadd.f32 0.0, %v264
      %v266 = vpop.f32.mrf.mxu0
      %267 = vdwg.mxu0
      %s268 = smul.u32 %s19, 256
      %s269 = sshra.s32 %s268, 7
      %s270 = sand.u32 %s268, 127
      %s271 = smul.addr %s269, 8
      %s272 = scalar_lea.vmem %s198, %s271
      %273 = vst [vmem:[%s272] sm:$0xff] %v252
      %274 = vst [vmem:[%s272 + $0x8] sm:$0xff] %v265
      %p275 = scmp.eq.s32.totalorder %s19, 0
      // Predicated region
      $region33: #{single_conv.1} parent=31 // pred_check
        %p276 = pneg %p275
      $region34: #{single_conv.1} parent=31 // pred_check_branch
        %278 = sbr.rel (%p276) target = $region36
      $region35: #{single_conv.1} parent=31 // pred_region
        %v279 = vld [vmem:[%s198] sm:$0xff]
        %v280 = vld [vmem:[%s198 + $0x8] sm:$0xff]
        %v281 = vadd.f32 %v279, %v280
        %282 = vadd.xlane.f32.xlu0 %v281
        %v283 = vpop.xlane.xlu0 %282
        %v284 = vrcp.pop 256.0
        %v285 = vmul.f32 256.0, %v284
        %v286 = vsub.f32 1.0, %v285
        %v287 = vmul.f32 %v284, %v286
        %v288 = vadd.f32 %v284, %v287
        %vm289 = vweird.f32 %v284
        %v290 = vsel %vm289, %v284, %v288
        %v291 = vmul.f32 %v283, %v290
        %v292 = vsub.f32 %v279, %v291
        %v293 = vsub.f32 %v280, %v291
        %v294 = vmul.f32 %v292, %v292
        %v295 = vmul.f32 %v293, %v293
        %v296 = vadd.f32 %v294, %v295
        %297 = vadd.xlane.f32.xlu0 %v296
        %v298 = vpop.xlane.xlu0 %297
        %v299 = vmul.f32 %v298, %v290
        %v300 = vld [vmem:[%s2] sm:$0xff]
        %v301 = vadd.f32 %v299, 1e-05
        %v302 = vrsqrt.pop %v301
        %v303 = vmul.f32 %v302, %v301
        %v304 = vmul.f32 %v303, %v302
        %v305 = vmul.f32 0.5, %v304
        %v306 = vsub.f32 1.5, %v305
        %v307 = vmul.f32 %v302, %v306
        %vm308 = vweird.f32 %v301
        %vm309 = vweird.f32 %v302
        %vm310 = vmor %vm308, %vm309
        %v311 = vsel %vm310, %v302, %v307
        %v312 = vmul.f32 %v300, %v311
        %314 = vset.pattern.permute.xlu0 0
        %315 = vperm.xlu0 %314, %v312
        %v316 = vpop.permute.xlu0 %315
        %v318 = vmul.f32 %v292, %v316
        %v319 = vmul.f32 %v293, %v316
        %321 = vset.pattern.permute.xlu0 1
        %322 = vperm.xlu0 %321, %v300
        %v323 = vpop.permute.xlu0 %322
        %v325 = vadd.f32 %v318, %v323
        %v326 = vadd.f32 %v319, %v323
        %v327 = vmax.f32 %v325, 0.0
        %v328 = vmax.f32 %v326, 0.0
        %329 = vst [vmem:[%s198] sm:$0xff] %v327
        %330 = vst [vmem:[%s198 + $0x8] sm:$0xff] %v328
      $region36: #{single_conv.1} parent=31 // pred_fallthru
        _
      %p331 = scmp.lt.s32.totalorder %s18, 1
      %s332 = scalar_select %p331, %s18, 1
      %s333 = smul.addr %s332, 2
      %s334 = smul.addr %s333, 8
      %s335 = scalar_lea.vmem %s3, %s334
      // Predicated region
      $region37: #{single_conv.1} parent=31 // pred_check
        %p336 = pneg %p114
      $region38: #{single_conv.1} parent=31 // pred_check_branch
        %338 = sbr.rel (%p336) target = $region40
      $region39: #{single_conv.1} parent=31 // pred_region
        _
      $region40: #{single_conv.1} parent=31 // pred_fallthru
        _
    $region32: #{single_conv.1} parent=5 // pred_fallthru
      _
    %p339 = scmp.le.s32.totalorder 2, %s9
    // Predicated region
    $region41: #{single_conv.1} parent=5 // pred_check
      %p340 = pneg %p339
    $region42: #{single_conv.1} parent=5 // pred_check_branch
      %342 = sbr.rel (%p340) target = $region44
    $region43: #{single_conv.1} parent=5 // pred_region
      %s343 = ssub.s32 %s9, 2
      // Predicated region
      $region45: #{single_conv.1} parent=43 // pred_check
        %p344 = pneg %p120
      $region46: #{single_conv.1} parent=43 // pred_check_branch
        %346 = sbr.rel (%p344) target = $region48
      $region47: #{single_conv.1} parent=43 // pred_region
        %p347 = scmp.lt.s32.totalorder %s20, 1
        %s348 = scalar_select %p347, %s20, 1
        %s349 = smul.addr %s348, 2
        %s350 = smul.addr %s349, 8
        %s351 = scalar_lea.vmem %s3, %s350
      $region48: #{single_conv.1} parent=43 // pred_fallthru
        _
    $region44: #{single_conv.1} parent=5 // pred_fallthru
      _
  $region6: #{single_conv.1} parent=0 // loop_footer
    %s13 = sadd.s32 1, %s9
  $region7: #{single_conv.1} parent=0 // loop_footer_branch
    %8 = sbr.rel target = $region3
  $region8: #{single_conv.1} parent=0 // loop_exit
    _

</llo_original>
